<compile_context>
chip_gen: v5e
topology: v5e:2x2
jax: 0.10.0
libtpu: 0.0.40
codegen_flags: <defaults>
</compile_context>

<pallas_src>
import functools

import jax
import jax.numpy as jnp
from jax.experimental import pallas as pl
from jax.experimental.pallas import tpu as pltpu


def _round_up(x, m):
    return (x + m - 1) // m * m


def _clap_mos_kernel(x_ref, wp_ref, bp_ref, wm_ref, bm_ref, o_ref, acc_ref,
                     *, inv_t, m, fold, tt, t_valid, mask_time):
    """Fused: time mean-pool -> audio_projection -> L2-norm -> mos_head.

    Grid: (batch_blocks, C, time_blocks); time/channel are reduction axes.

    x_ref  : (TB, TT, fold*M) f32   input tile (channel dim squeezed by BlockSpec)
    wp_ref : (C, M, P)        bf16  audio_projection weight (VMEM-resident)
    bp_ref : (1, P)           f32   audio_projection bias (VMEM-resident)
    wm_ref : (1, P)           f32   mos_head weight as a row (VMEM-resident)
    bm_ref : (1, 1)           f32   mos_head bias (SMEM scalar)
    o_ref  : (TB, 128)        f32   lane-dense output slab
    acc_ref: (C, TB, fold*M)  f32   per-channel time-sum accumulator scratch
    """
    c = pl.program_id(1)
    t = pl.program_id(2)
    n_c = pl.num_programs(1)
    n_t = pl.num_programs(2)

    @pl.when(jnp.logical_and(c == 0, t == 0))
    def _init():
        acc_ref[...] = jnp.zeros_like(acc_ref)

    xb = x_ref[...]                                      # (TB, TT, fold*M)
    if mask_time:
        # Zero the rows of the last ragged time tile (instead of HBM padding).
        row = t * tt + jax.lax.broadcasted_iota(jnp.int32, (1, tt, 1), 1)
        xb = jnp.where(row < t_valid, xb, 0.0)
    acc_ref[c] = acc_ref[c] + jnp.sum(xb, axis=1)        # (TB, fold*M)

    @pl.when(jnp.logical_and(c == n_c - 1, t == n_t - 1))
    def _finalize():
        num_c = acc_ref.shape[0]
        emb = None
        for ci in range(num_c):                          # static loop (C small)
            acc_c = acc_ref[ci]                          # (TB, fold*M)
            pooled = acc_c[:, :m]
            for j in range(1, fold):                     # un-fold lane groups
                pooled = pooled + acc_c[:, j * m:(j + 1) * m]
            pooled = pooled * inv_t                      # mean over the real T
            # audio_projection on the MXU: bf16 inputs, f32 accumulation.
            part = jnp.dot(pooled.astype(jnp.bfloat16), wp_ref[ci],
                           preferred_element_type=jnp.float32)
            emb = part if emb is None else emb + part
        emb = emb + bp_ref[...]                          # (TB, P)
        # Fused L2-norm + mos_head:
        #   mos = (emb / ||emb||) @ w_mos + b_mos
        #       = sum(emb * w_mos) * rsqrt(sum(emb^2) + eps) + b_mos
        dot = jnp.sum(emb * wm_ref[...], axis=-1, keepdims=True)   # (TB, 1)
        nrm = jnp.sum(emb * emb, axis=-1, keepdims=True)           # (TB, 1)
        score = dot * jax.lax.rsqrt(nrm + 1e-12) + bm_ref[0, 0]
        # Lane-dense (unmasked) store: broadcast score across the 128 lanes.
        o_ref[...] = jnp.broadcast_to(score, o_ref.shape)


def custom_model_forward(input_values, params):
    """CustomModel.forward: mos_head(base_model(input_values).audio_embeds).

    input_values: (B, C, T, M) float32 (mel-spectrogram style input).
    Returns (B, 1) float32 MOS predictions.
    """
    w_proj, b_proj, w_mos, b_mos = params
    B, C, T, M = input_values.shape
    P = w_proj.shape[1]

    x = input_values.astype(jnp.float32)      # no-op for f32 inputs

    # Fold time steps into the lane dim when M < 128 (metadata-only reshape).
    if (M % 128 != 0) and (M < 128) and (128 % M == 0) and (T % (128 // M) == 0):
        fold = 128 // M
    else:
        fold = 1
    T_f = T // fold
    Mlane = fold * M
    x = x.reshape(B, C, T_f, Mlane)           # free: contiguous trailing dims

    # ---------------- tile selection (VMEM-budgeted, no HBM padding) ----------
    lane = 128
    Mlane_pad = _round_up(Mlane, lane)        # lane padding inside VMEM
    row_bytes = Mlane_pad * 4                 # f32

    Bp = _round_up(B, 8)
    if Bp >= 16:
        # >= 2 batch blocks so both v7x TensorCores get work on the parallel axis.
        TB = _round_up(pl.cdiv(Bp, 2), 8)
    else:
        TB = Bp
    TB = min(TB, 128)

    input_budget = 12 * 1024 * 1024           # double-buffered input (v5e-safe)
    max_rows = max(8, input_budget // (2 * TB * row_bytes))
    if T_f <= 512 and T_f <= max_rows:
        TT = T_f                              # one reduction step, no loop overhead
    else:
        tgt = max(8, (2 * 1024 * 1024) // (TB * row_bytes))   # ~2 MiB blocks
        TT = _round_up(min(tgt, max_rows), 8)
        TT = min(TT, _round_up(T_f, 8))
    nb = pl.cdiv(B, TB)
    nt = pl.cdiv(T_f, TT)
    mask_time = (nt * TT != T_f)              # only the last tile is ragged

    # Weights (small copies only; bf16 halves projection-weight DMA).
    wp = w_proj.reshape(C, M, P).astype(jnp.bfloat16)   # (C, M, P)
    bp = b_proj.reshape(1, P).astype(jnp.float32)       # (1, P)
    wm = w_mos.reshape(1, P).astype(jnp.float32)        # (1, P)
    bm = b_mos.reshape(1, 1).astype(jnp.float32)        # (1, 1) SMEM scalar

    # Explicit VMEM budget -> vmem_limit_bytes (cap 48 MiB: v7x physical is 64 MiB).
    P_pad = _round_up(P, lane)
    need = (2 * TB * TT * Mlane_pad * 4          # double-buffered input tiles
            + C * _round_up(M, 16) * P_pad * 2   # wp (bf16, single buffer)
            + 2 * 8 * P_pad * 4                  # bp, wm
            + C * TB * Mlane_pad * 4             # accumulator scratch
            + 2 * TB * lane * 4)                 # output slab
    vmem_limit = int(min(max(need + (4 << 20), 8 << 20), 48 << 20))

    kernel = functools.partial(_clap_mos_kernel, inv_t=1.0 / T, m=M, fold=fold,
                               tt=TT, t_valid=T_f, mask_time=mask_time)

    grid = (nb, C, nt)                        # (batch: parallel, chan/time: reduce)
    out = pl.pallas_call(
        kernel,
        out_shape=jax.ShapeDtypeStruct((nb * TB, 128), jnp.float32),
        grid_spec=pltpu.PrefetchScalarGridSpec(
            num_scalar_prefetch=0,
            grid=grid,
            in_specs=[
                # input tiles; channel dim squeezed out of the kernel view
                pl.BlockSpec((TB, None, TT, Mlane), lambda b, c, t: (b, c, t, 0)),
                # resident weights: constant index_map, single-buffered
                pl.BlockSpec((C, M, P), lambda b, c, t: (0, 0, 0),
                             pipeline_mode=pl.Buffered(1)),
                pl.BlockSpec((1, P), lambda b, c, t: (0, 0),
                             pipeline_mode=pl.Buffered(1)),
                pl.BlockSpec((1, P), lambda b, c, t: (0, 0),
                             pipeline_mode=pl.Buffered(1)),
                pl.BlockSpec(memory_space=pltpu.MemorySpace.SMEM),   # b_mos scalar
            ],
            out_specs=pl.BlockSpec((TB, 128), lambda b, c, t: (b, 0)),
            scratch_shapes=[pltpu.VMEM((C, TB, Mlane), jnp.float32)],
        ),
        compiler_params=pltpu.CompilerParams(
            dimension_semantics=("parallel", "arbitrary", "arbitrary"),
            vmem_limit_bytes=vmem_limit,
        ),
    )(x, wp, bp, wm, bm)

    return out[:B, :1]


def init_params(key, feat_dim, projection_dim):
    k0, k1, k2, k3 = jax.random.split(key, 4)
    w_proj = jax.random.normal(k0, (feat_dim, projection_dim), jnp.float32) * 0.02
    b_proj = jax.random.normal(k1, (1, projection_dim), jnp.float32) * 0.02
    w_mos = jax.random.normal(k2, (projection_dim, 1), jnp.float32) * 0.02
    b_mos = jax.random.normal(k3, (1, 1), jnp.float32) * 0.02
    return w_proj, b_proj, w_mos, b_mos


if __name__ == "__main__":
    # Small synthetic shapes: batch=2, channel=1, time=16, mel=32,
    # projection_dim=32 (stand-in for CLAP's 512).
    B, C, T, M = 2, 1, 16, 32
    PROJ = 32

    key = jax.random.PRNGKey(0)
    k_in, k_par = jax.random.split(key)
    input_values = jax.random.normal(k_in, (B, C, T, M), jnp.float32)
    params = init_params(k_par, C * M, PROJ)

    out = jax.block_until_ready(custom_model_forward(input_values, params))

    # Pure-JAX reference (same stubbed encoder / bf16 projection as the kernel).
    w_proj, b_proj, w_mos, b_mos = params
    pooled = jnp.mean(input_values.astype(jnp.float32), axis=2).reshape(B, C * M)
    emb = jnp.dot(pooled.astype(jnp.bfloat16), w_proj.astype(jnp.bfloat16),
                  preferred_element_type=jnp.float32) + b_proj.reshape(1, PROJ)
    emb = emb * jax.lax.rsqrt(jnp.sum(emb * emb, axis=-1, keepdims=True) + 1e-12)
    ref = emb @ w_mos + b_mos.reshape(1, 1)

    assert out.shape == (B, 1), out.shape
    assert jnp.allclose(out, ref, atol=1e-3, rtol=1e-3), (out, ref)
    print("KERNEL_OK")
</pallas_src>

<mosaic_0001>
module attributes {stable_mosaic.version = 11 : i64} {
  func.func @_clap_mos_kernel(%arg0: i32, %arg1: i32, %arg2: i32, %arg3: memref<8x1x4x128xf32, #tpu.memory_space<vmem>>, %arg4: memref<1x32x32xbf16, #tpu.memory_space<vmem>>, %arg5: memref<1x32xf32, #tpu.memory_space<vmem>>, %arg6: memref<1x32xf32, #tpu.memory_space<vmem>>, %arg7: memref<1x1xf32, #tpu.memory_space<smem>>, %arg8: memref<8x128xf32, #tpu.memory_space<vmem>>, %arg9: memref<1x8x128xf32, #tpu.memory_space<vmem>>) attributes {dimension_semantics = [#tpu.dimension_semantics<parallel>, #tpu.dimension_semantics<arbitrary>, #tpu.dimension_semantics<arbitrary>], iteration_bounds = array<i64: 1, 1, 1>, scalar_prefetch = 0 : i64, scratch_operands = 1 : i64, tpu.core_type = #tpu.core_type<tc>, window_params = [{transform_indices = @transform_0, window_bounds = array<i64: 8, 1, 4, 128>}, {pipeline_mode = #tpu.pipeline_mode<synchronous>, transform_indices = @transform_1, window_bounds = array<i64: 1, 32, 32>}, {pipeline_mode = #tpu.pipeline_mode<synchronous>, transform_indices = @transform_2, window_bounds = array<i64: 1, 32>}, {pipeline_mode = #tpu.pipeline_mode<synchronous>, transform_indices = @transform_3, window_bounds = array<i64: 1, 32>}, {transform_indices = @transform_4, window_bounds = array<i64: 1, 1>}, {transform_indices = @transform_5, window_bounds = array<i64: 8, 128>}]} {
    %c0_i32 = arith.constant 0 : i32
    %0 = arith.cmpi eq, %arg1, %c0_i32 : i32
    %c0_i32_0 = arith.constant 0 : i32
    %1 = arith.cmpi eq, %arg2, %c0_i32_0 : i32
    %2 = arith.andi %0, %1 : i1
    %3 = arith.extui %2 : i1 to i32
    %c0_i32_1 = arith.constant 0 : i32
    %4 = arith.cmpi ne, %3, %c0_i32_1 : i32
    scf.if %4 {
      %cst_12 = arith.constant 0.000000e+00 : f32
      %21 = vector.broadcast %cst_12 : f32 to vector<1x8x128xf32>
      %c0_13 = arith.constant 0 : index
      %c0_14 = arith.constant 0 : index
      %c0_15 = arith.constant 0 : index
      %22 = vector.load %arg9[%c0_13, %c0_14, %c0_15] : memref<1x8x128xf32, #tpu.memory_space<vmem>>, vector<1x8x128xf32>
      tpu.vector_store %arg9[%c0_13, %c0_14, %c0_15], %21 {strides = array<i32>} : memref<1x8x128xf32, #tpu.memory_space<vmem>>, vector<1x8x128xf32>,
    } else {
    }
    %c0 = arith.constant 0 : index
    %c0_2 = arith.constant 0 : index
    %c0_3 = arith.constant 0 : index
    %c0_4 = arith.constant 0 : index
    %5 = vector.load %arg3[%c0, %c0_2, %c0_3, %c0_4] : memref<8x1x4x128xf32, #tpu.memory_space<vmem>>, vector<8x1x4x128xf32>
    %6 = vector.shape_cast %5 : vector<8x1x4x128xf32> to vector<8x4x128xf32>
    %7 = arith.index_cast %arg1 : i32 to index
    %c0_5 = arith.constant 0 : index
    %c0_6 = arith.constant 0 : index
    %8 = vector.load %arg9[%7, %c0_5, %c0_6] : memref<1x8x128xf32, #tpu.memory_space<vmem>>, vector<1x8x128xf32>
    %9 = vector.shape_cast %8 : vector<1x8x128xf32> to vector<8x128xf32>
    %cst = arith.constant dense<0.000000e+00> : vector<8x128xf32>
    %10 = vector.multi_reduction <add>, %6, %cst [1] : vector<8x4x128xf32> to vector<8x128xf32>
    %11 = arith.addf %9, %10 : vector<8x128xf32>
    %12 = arith.index_cast %arg1 : i32 to index
    %c0_7 = arith.constant 0 : index
    %c0_8 = arith.constant 0 : index
    %13 = vector.load %arg9[%12, %c0_7, %c0_8] : memref<1x8x128xf32, #tpu.memory_space<vmem>>, vector<1x8x128xf32>
    %14 = vector.shape_cast %13 : vector<1x8x128xf32> to vector<8x128xf32>
    %15 = vector.shape_cast %11 : vector<8x128xf32> to vector<1x8x128xf32>
    tpu.vector_store %arg9[%12, %c0_7, %c0_8], %15 {strides = array<i32>} : memref<1x8x128xf32, #tpu.memory_space<vmem>>, vector<1x8x128xf32>,
    %c0_i32_9 = arith.constant 0 : i32
    %16 = arith.cmpi eq, %arg1, %c0_i32_9 : i32
    %c0_i32_10 = arith.constant 0 : i32
    %17 = arith.cmpi eq, %arg2, %c0_i32_10 : i32
    %18 = arith.andi %16, %17 : i1
    %19 = arith.extui %18 : i1 to i32
    %c0_i32_11 = arith.constant 0 : i32
    %20 = arith.cmpi ne, %19, %c0_i32_11 : i32
    scf.if %20 {
      %c0_12 = arith.constant 0 : index
      %c0_13 = arith.constant 0 : index
      %c0_14 = arith.constant 0 : index
      %21 = vector.load %arg9[%c0_12, %c0_13, %c0_14] : memref<1x8x128xf32, #tpu.memory_space<vmem>>, vector<1x8x128xf32>
      %22 = vector.shape_cast %21 : vector<1x8x128xf32> to vector<8x128xf32>
      %23 = vector.extract_strided_slice %22 {offsets = [0, 0], sizes = [8, 32], strides = [1, 1]} : vector<8x128xf32> to vector<8x32xf32>
      %24 = vector.extract_strided_slice %22 {offsets = [0, 32], sizes = [8, 32], strides = [1, 1]} : vector<8x128xf32> to vector<8x32xf32>
      %25 = arith.addf %23, %24 : vector<8x32xf32>
      %26 = vector.extract_strided_slice %22 {offsets = [0, 64], sizes = [8, 32], strides = [1, 1]} : vector<8x128xf32> to vector<8x32xf32>
      %27 = arith.addf %25, %26 : vector<8x32xf32>
      %28 = vector.extract_strided_slice %22 {offsets = [0, 96], sizes = [8, 32], strides = [1, 1]} : vector<8x128xf32> to vector<8x32xf32>
      %29 = arith.addf %27, %28 : vector<8x32xf32>
      %cst_15 = arith.constant 6.250000e-02 : f32
      %30 = vector.broadcast %cst_15 : f32 to vector<8x32xf32>
      %31 = arith.mulf %29, %30 : vector<8x32xf32>
      %32 = arith.truncf %31 : vector<8x32xf32> to vector<8x32xbf16>
      %c0_16 = arith.constant 0 : index
      %c0_17 = arith.constant 0 : index
      %c0_18 = arith.constant 0 : index
      %33 = vector.load %arg4[%c0_16, %c0_17, %c0_18] : memref<1x32x32xbf16, #tpu.memory_space<vmem>>, vector<1x32x32xbf16>
      %34 = vector.shape_cast %33 : vector<1x32x32xbf16> to vector<32x32xbf16>
      %cst_19 = arith.constant dense<0.000000e+00> : vector<8x32xf32>
      %35 = tpu.matmul %32, %34, %cst_19 {dimension_numbers = #tpu.dot_dimension_numbers<[1], [0], [0], [1], [0, 0, 1, 1], [], []>} : vector<8x32xbf16>, vector<32x32xbf16>, vector<8x32xf32> -> vector<8x32xf32>
      %c0_20 = arith.constant 0 : index
      %c0_21 = arith.constant 0 : index
      %36 = vector.load %arg5[%c0_20, %c0_21] : memref<1x32xf32, #tpu.memory_space<vmem>>, vector<1x32xf32>
      %37 = vector.broadcast %36 : vector<1x32xf32> to vector<8x32xf32>
      %38 = arith.addf %35, %37 : vector<8x32xf32>
      %c0_22 = arith.constant 0 : index
      %c0_23 = arith.constant 0 : index
      %39 = vector.load %arg6[%c0_22, %c0_23] : memref<1x32xf32, #tpu.memory_space<vmem>>, vector<1x32xf32>
      %40 = vector.broadcast %39 : vector<1x32xf32> to vector<8x32xf32>
      %41 = arith.mulf %38, %40 : vector<8x32xf32>
      %cst_24 = arith.constant dense<0.000000e+00> : vector<8xf32>
      %42 = vector.multi_reduction <add>, %41, %cst_24 [1] : vector<8x32xf32> to vector<8xf32>
      %43 = vector.shape_cast %42 : vector<8xf32> to vector<8x1xf32>
      %44 = arith.mulf %38, %38 : vector<8x32xf32>
      %cst_25 = arith.constant dense<0.000000e+00> : vector<8xf32>
      %45 = vector.multi_reduction <add>, %44, %cst_25 [1] : vector<8x32xf32> to vector<8xf32>
      %46 = vector.shape_cast %45 : vector<8xf32> to vector<8x1xf32>
      %cst_26 = arith.constant 9.99999996E-13 : f32
      %47 = vector.broadcast %cst_26 : f32 to vector<8x1xf32>
      %48 = arith.addf %46, %47 : vector<8x1xf32>
      %49 = math.rsqrt %48 : vector<8x1xf32>
      %50 = arith.mulf %43, %49 : vector<8x1xf32>
      %c0_27 = arith.constant 0 : index
      %c0_28 = arith.constant 0 : index
      %51 = memref.load %arg7[%c0_27, %c0_28] : memref<1x1xf32, #tpu.memory_space<smem>>
      %52 = vector.broadcast %51 : f32 to vector<8x1xf32>
      %53 = arith.addf %50, %52 : vector<8x1xf32>
      %54 = vector.shape_cast %53 : vector<8x1xf32> to vector<8x1xf32>
      %55 = vector.broadcast %54 : vector<8x1xf32> to vector<8x128xf32>
      %c0_29 = arith.constant 0 : index
      %c0_30 = arith.constant 0 : index
      %56 = vector.load %arg8[%c0_29, %c0_30] : memref<8x128xf32, #tpu.memory_space<vmem>>, vector<8x128xf32>
      tpu.vector_store %arg8[%c0_29, %c0_30], %55 {strides = array<i32>} : memref<8x128xf32, #tpu.memory_space<vmem>>, vector<8x128xf32>,
    } else {
    }
    return
  }
  func.func @transform_0(%arg0: i32, %arg1: i32, %arg2: i32) -> (i32, i32, i32, i32) {
    %c0_i32 = arith.constant 0 : i32
    %c0_i32_0 = arith.constant 0 : i32
    return %arg0, %arg1, %arg2, %c0_i32 : i32, i32, i32, i32
  }
  func.func @transform_1(%arg0: i32, %arg1: i32, %arg2: i32) -> (i32, i32, i32) {
    %c0_i32 = arith.constant 0 : i32
    %c0_i32_0 = arith.constant 0 : i32
    %c0_i32_1 = arith.constant 0 : i32
    %c0_i32_2 = arith.constant 0 : i32
    return %c0_i32, %c0_i32_0, %c0_i32_1 : i32, i32, i32
  }
  func.func @transform_2(%arg0: i32, %arg1: i32, %arg2: i32) -> (i32, i32) {
    %c0_i32 = arith.constant 0 : i32
    %c0_i32_0 = arith.constant 0 : i32
    %c0_i32_1 = arith.constant 0 : i32
    return %c0_i32, %c0_i32_0 : i32, i32
  }
  func.func @transform_3(%arg0: i32, %arg1: i32, %arg2: i32) -> (i32, i32) {
    %c0_i32 = arith.constant 0 : i32
    %c0_i32_0 = arith.constant 0 : i32
    %c0_i32_1 = arith.constant 0 : i32
    return %c0_i32, %c0_i32_0 : i32, i32
  }
  func.func @transform_4(%arg0: i32, %arg1: i32, %arg2: i32) -> (i32, i32) {
    %c0_i32 = arith.constant 0 : i32
    %c0_i32_0 = arith.constant 0 : i32
    %c0_i32_1 = arith.constant 0 : i32
    return %c0_i32, %c0_i32_0 : i32, i32
  }
  func.func @transform_5(%arg0: i32, %arg1: i32, %arg2: i32) -> (i32, i32) {
    %c0_i32 = arith.constant 0 : i32
    %c0_i32_0 = arith.constant 0 : i32
    return %arg0, %c0_i32 : i32, i32
  }
}

</mosaic_0001>

<llo_original>
// kernel: tpu_custom_call.1
$region0: #{tpu_custom_call.1}
  #allocation0 [shape = 'u32[]', space=smem, size = 0x4, offset = 0x4, fixed_abs, tag = 'smem constant byte address 0x4 - core index']
  #allocation1 [shape = 'u32[72,128]{1,0:T(1,128)}', space=vmem, size = 0x9000, scoped, tag = 'internal scratch']
  #allocation2 [shape = 'f32[1,8,128]{2,1,0:T(8,128)}', space=vmem, size = 0x1000, scoped, tag = 'scratch operand']
  #allocation3 [shape = 'f32[1,1]{1,0:T(1,128)S(6)}', space=smem, size = 0x200, scoped, tag = 'scoped memory for tpu_custom_call.1']
  %s0 = inlined_call_operand.hbm [shape: f32[2,1,4,128], index: 0, kind: input, shape index: {}]
  %s1 = inlined_call_operand.hbm [shape: bf16[1,32,32], index: 1, kind: input, shape index: {}]
  %s2 = inlined_call_operand.vmem [shape: f32[1,32], index: 2, kind: input, shape index: {}]
  %s3 = inlined_call_operand.vmem [shape: f32[1,32], index: 3, kind: input, shape index: {}]
  %s4 = inlined_call_operand.<no memory space> [shape: f32[1,1], index: 4, kind: input, shape index: {}]
  %s5 = inlined_call_operand.hbm [shape: f32[8,128], index: 5, kind: output, shape index: {}]
  %s6 = sld [smem:[#allocation0]]
  $region46: #{tpu_custom_call.1} parent=0
    _
  %s8 = ssub.s32 1, %s6
  %s9 = scalar_select 0, %s8, %s6
  %10 = sst [smem:[#allocation3]] %s4
  $region1: #{tpu_custom_call.1} parent=0
    #allocation4 [shape = 'u8[16384]{0}', space=vmem, size = 0x4000, scoped, tag = 'input window, operand 0, single buffered']
    #allocation5 [shape = 's32[1]{0}', space=sflag, size = 0x4, scoped, tag = 'scoped memory for tpu_custom_call.1']
    #allocation6 [shape = 's32[1]{0}', space=sflag, size = 0x4, scoped, tag = 'scoped memory for tpu_custom_call.1']
    #allocation7 [shape = 'u8[8192]{0}', space=vmem, size = 0x2000, scoped, tag = 'input window, operand 1, single buffered']
    #allocation8 [shape = 's32[1]{0}', space=sflag, size = 0x4, scoped, tag = 'scoped memory for tpu_custom_call.1']
    #allocation9 [shape = 'u8[4096]{0}', space=vmem, size = 0x1000, scoped, tag = 'output window, operand 0, single buffered']
    %11 = vsyncpa [#allocation5], 0
    %12 = vsyncpa [#allocation8], 0
    %13 = vsyncpa [#allocation6], 0
    // Predicated region
    $region2: #{tpu_custom_call.1} parent=1 // pred_check
      _
    $region3: #{tpu_custom_call.1} parent=1 // pred_check_branch
      %15 = sbr.rel (0) target = $region5
    $region4: #{tpu_custom_call.1} parent=1 // pred_region
      %17 = vsyncadd [#allocation5], 384
      %s18 = sshll.u32 %s0, 4
      %s19 = int_to_ptr.hbm [resolvable:$true] %s18
      %s20 = sshll.u32 [#allocation4], 4
      %s21 = int_to_ptr.vmem [resolvable:$true] %s20
      %26 = dma.hbm_to_vmem [thread:$0]  %s19, 128, %s21, [#allocation5], 64, 64, 4
    $region5: #{tpu_custom_call.1} parent=1 // pred_fallthru
      _
    // Predicated region
    $region6: #{tpu_custom_call.1} parent=1 // pred_check
      _
    $region7: #{tpu_custom_call.1} parent=1 // pred_check_branch
      %28 = sbr.rel (0) target = $region9
    $region8: #{tpu_custom_call.1} parent=1 // pred_region
      %30 = vsyncadd [#allocation8], 0
      %s31 = sshll.u32 %s1, 4
      %s32 = int_to_ptr.hbm [resolvable:$true] %s31
      %s33 = sshll.u32 [#allocation7], 4
      %s34 = int_to_ptr.vmem [resolvable:$true] %s33
      %39 = dma.hbm_to_vmem [thread:$0]  %s32, 256, %s34, [#allocation8], 64, 64, 4
    $region9: #{tpu_custom_call.1} parent=1 // pred_fallthru
      _
    // Predicated region
    $region10: #{tpu_custom_call.1} parent=1 // pred_check
      _
    $region11: #{tpu_custom_call.1} parent=1 // pred_check_branch
      %41 = sbr.rel (0) target = $region13
    $region12: #{tpu_custom_call.1} parent=1 // pred_region
      _
    $region13: #{tpu_custom_call.1} parent=1 // pred_fallthru
      _
    // Predicated region
    $region14: #{tpu_custom_call.1} parent=1 // pred_check
      _
    $region15: #{tpu_custom_call.1} parent=1 // pred_check_branch
      %43 = sbr.rel (0) target = $region17
    $region16: #{tpu_custom_call.1} parent=1 // pred_region
      _
    $region17: #{tpu_custom_call.1} parent=1 // pred_fallthru
      _
    // Predicated region
    $region18: #{tpu_custom_call.1} parent=1 // pred_check
      _
    $region19: #{tpu_custom_call.1} parent=1 // pred_check_branch
      %45 = sbr.rel (0) target = $region21
    $region20: #{tpu_custom_call.1} parent=1 // pred_region
      _
    $region21: #{tpu_custom_call.1} parent=1 // pred_fallthru
      _
    // Predicated region
    $region22: #{tpu_custom_call.1} parent=1 // pred_check
      _
    $region23: #{tpu_custom_call.1} parent=1 // pred_check_branch
      %47 = sbr.rel (0) target = $region25
    $region24: #{tpu_custom_call.1} parent=1 // pred_region
      %49 = dma.done [#allocation5], 512
    $region25: #{tpu_custom_call.1} parent=1 // pred_fallthru
      _
    // Predicated region
    $region26: #{tpu_custom_call.1} parent=1 // pred_check
      _
    $region27: #{tpu_custom_call.1} parent=1 // pred_check_branch
      %51 = sbr.rel (0) target = $region29
    $region28: #{tpu_custom_call.1} parent=1 // pred_region
      %53 = dma.done [#allocation8], 256
    $region29: #{tpu_custom_call.1} parent=1 // pred_fallthru
      _
    %p55 = scmp.eq.s32.totalorder 0, 0
    %p56 = scmp.eq.s32.totalorder 0, 0
    %p57 = pnand %p55, %p56
    %p58 = pneg %p57
    // Predicated region
    $region30: #{tpu_custom_call.1} parent=1 // pred_check
      _
    $region31: #{tpu_custom_call.1} parent=1 // pred_check_branch
      %60 = sbr.rel (%p57) target = $region33
    $region32: #{tpu_custom_call.1} parent=1 // pred_region
      %61 = vst [vmem:[#allocation2] sm:$0xff] 0.0
    $region33: #{tpu_custom_call.1} parent=1 // pred_fallthru
      _
    %v62 = vld [vmem:[#allocation4] sm:$0xf]
    %v63 = vld [vmem:[#allocation4 + $0x4] sm:$0xf]
    %v64 = vld [vmem:[#allocation4 + $0x8] sm:$0xf]
    %v65 = vld [vmem:[#allocation4 + $0xc] sm:$0xf]
    %v66 = vld [vmem:[#allocation4 + $0x10] sm:$0xf]
    %v67 = vld [vmem:[#allocation4 + $0x14] sm:$0xf]
    %v68 = vld [vmem:[#allocation4 + $0x18] sm:$0xf]
    %v69 = vld [vmem:[#allocation4 + $0x1c] sm:$0xf]
    %s70 = smul.u32 0, 8
    %s71 = scalar_lea.vmem [#allocation2], %s70
    %v72 = vld [vmem:[%s71] sm:$0xff]
    %vm73 = vcmask 1043456
    %v74 = vsel %vm73, %v62, 0.0
    %v75 = vrot.slane %v74, 4
    %v76 = vadd.f32 %v74, %v75
    %v77 = vrot.slane %v76, 2
    %v78 = vadd.f32 %v76, %v77
    %v79 = vrot.slane %v78, 1
    %v80 = vadd.f32 %v78, %v79
    %v81 = vsel %vm73, %v63, 0.0
    %v82 = vrot.slane %v81, 4
    %v83 = vadd.f32 %v81, %v82
    %v84 = vrot.slane %v83, 2
    %v85 = vadd.f32 %v83, %v84
    %v86 = vrot.slane %v85, 1
    %v87 = vadd.f32 %v85, %v86
    %v88 = vsel %vm73, %v64, 0.0
    %v89 = vrot.slane %v88, 4
    %v90 = vadd.f32 %v88, %v89
    %v91 = vrot.slane %v90, 2
    %v92 = vadd.f32 %v90, %v91
    %v93 = vrot.slane %v92, 1
    %v94 = vadd.f32 %v92, %v93
    %v95 = vsel %vm73, %v65, 0.0
    %v96 = vrot.slane %v95, 4
    %v97 = vadd.f32 %v95, %v96
    %v98 = vrot.slane %v97, 2
    %v99 = vadd.f32 %v97, %v98
    %v100 = vrot.slane %v99, 1
    %v101 = vadd.f32 %v99, %v100
    %v102 = vsel %vm73, %v66, 0.0
    %v103 = vrot.slane %v102, 4
    %v104 = vadd.f32 %v102, %v103
    %v105 = vrot.slane %v104, 2
    %v106 = vadd.f32 %v104, %v105
    %v107 = vrot.slane %v106, 1
    %v108 = vadd.f32 %v106, %v107
    %v109 = vsel %vm73, %v67, 0.0
    %v110 = vrot.slane %v109, 4
    %v111 = vadd.f32 %v109, %v110
    %v112 = vrot.slane %v111, 2
    %v113 = vadd.f32 %v111, %v112
    %v114 = vrot.slane %v113, 1
    %v115 = vadd.f32 %v113, %v114
    %v116 = vsel %vm73, %v68, 0.0
    %v117 = vrot.slane %v116, 4
    %v118 = vadd.f32 %v116, %v117
    %v119 = vrot.slane %v118, 2
    %v120 = vadd.f32 %v118, %v119
    %v121 = vrot.slane %v120, 1
    %v122 = vadd.f32 %v120, %v121
    %v123 = vsel %vm73, %v69, 0.0
    %v124 = vrot.slane %v123, 4
    %v125 = vadd.f32 %v123, %v124
    %v126 = vrot.slane %v125, 2
    %v127 = vadd.f32 %v125, %v126
    %v128 = vrot.slane %v127, 1
    %v129 = vadd.f32 %v127, %v128
    %vm138 = vcmask 1041409
    %v139 = vsel %vm138, %v87, %v80
    %vm140 = vcmask 1042434
    %v141 = vsel %vm140, %v94, %v139
    %vm142 = vcmask 1043459
    %v143 = vsel %vm142, %v101, %v141
    %vm144 = vcmask 1044484
    %v145 = vsel %vm144, %v108, %v143
    %vm146 = vcmask 1045509
    %v147 = vsel %vm146, %v115, %v145
    %vm148 = vcmask 1046534
    %v149 = vsel %vm148, %v122, %v147
    %vm150 = vcmask 1047559
    %v151 = vsel %vm150, %v129, %v149
    %v153 = vadd.f32 %v72, %v151
    %154 = vst [vmem:[%s71] sm:$0xff] %v153
    // Predicated region
    $region34: #{tpu_custom_call.1} parent=1 // pred_check
      _
    $region35: #{tpu_custom_call.1} parent=1 // pred_check_branch
      %156 = sbr.rel (%p57) target = $region37
    $region36: #{tpu_custom_call.1} parent=1 // pred_region
      %v157 = vld [vmem:[#allocation2] sm:$0xff]
      %159 = vrot.lane.b32.xlu0 %v157, 96
      %v160 = vpop.permute.xlu0 %159
      %v162 = vadd.f32 %v157, %v160
      %163 = vrot.lane.b32.xlu0 %v157, 64
      %v164 = vpop.permute.xlu0 %163
      %v166 = vadd.f32 %v162, %v164
      %167 = vrot.lane.b32.xlu0 %v157, 32
      %v168 = vpop.permute.xlu0 %167
      %v170 = vadd.f32 %v166, %v168
      %v171 = vmul.f32 %v170, 0.0625
      %v172 = vpack.c.bf16 %v171, %v171
      %v173 = vld [vmem:[#allocation7] sm:$0xf]
      %v174 = vld [vmem:[#allocation7 + $0x4] sm:$0xf]
      %v175 = vld [vmem:[#allocation7 + $0x8] sm:$0xf]
      %v176 = vld [vmem:[#allocation7 + $0xc] sm:$0xf]
      %v177 = vld [vmem:[%s2] sm:$0x1]
      %v179 = vperm.slane %v177, 0
      %v185 = vunpack.c.l.b16 %v173
      %v186 = vunpack.c.l.b16 %v174
      %v187 = vunpack.c.l.b16 %v175
      %v188 = vunpack.c.l.b16 %v176
      %v189 = vpack.c.b16 %v186, %v185
      %v190 = vpack.c.b16 %v188, %v187
      %vm193 = vcmask 261120
      %v195 = vsel %vm193, %v172, 0
      %197 = vmatpush.bf16.msra.mxu0 0
      %198 = vmatpush.bf16.msra.mxu0 0
      %199 = vmatpush.bf16.msra.mxu0 0
      %200 = vmatpush.bf16.msra.mxu0 0
      %201 = vmatpush.bf16.msra.mxu0 0
      %202 = vmatpush.bf16.msra.mxu0 0
      %203 = vmatpush.bf16.msra.mxu0 %v190
      %204 = vmatpush.bf16.msra.mxu0 %v189
      %205 = vmatmul.bf16.gmra.mxu0 %v195
      %v206 = vpop.f32.mrf.mxu0
      %v207 = vadd.f32 %v179, %v206
      %v208 = vpop.f32.mrf.mxu0
      %209 = vdwg.mxu0
      %v210 = vld [vmem:[%s3] sm:$0x1]
      %v212 = vperm.slane %v210, 0
      %v214 = vmul.f32 %v207, %v212
      %v215 = vsel %vm193, %v214, 0.0
      %216 = vadd.xlane.f32.xlu0 %v215
      %v217 = vpop.xlane.xlu0 %216
      %v218 = vmul.f32 %v207, %v207
      %v219 = vsel %vm193, %v218, 0.0
      %220 = vadd.xlane.f32.xlu0 %v219
      %v221 = vpop.xlane.xlu0 %220
      %v222 = vadd.f32 %v221, 1e-12
      %v223 = vrsqrt.pop %v222
      %v224 = vmul.f32 %v223, %v222
      %v225 = vmul.f32 %v224, %v223
      %v226 = vmul.f32 0.5, %v225
      %v227 = vsub.f32 1.5, %v226
      %v228 = vmul.f32 %v223, %v227
      %vm229 = vweird.f32 %v222
      %vm230 = vweird.f32 %v223
      %vm231 = vmor %vm229, %vm230
      %v232 = vsel %vm231, %v223, %v228
      %v233 = vmul.f32 %v217, %v232
      %s234 = sld [smem:[#allocation3]]
      %v235 = vstv %s234
      %v236 = vadd.f32 %v233, %v235
      %237 = vst [vmem:[#allocation9] sm:$0xff] %v236
    $region37: #{tpu_custom_call.1} parent=1 // pred_fallthru
      _
    // Predicated region
    $region38: #{tpu_custom_call.1} parent=1 // pred_check
      _
    $region39: #{tpu_custom_call.1} parent=1 // pred_check_branch
      %239 = sbr.rel (0) target = $region41
    $region40: #{tpu_custom_call.1} parent=1 // pred_region
      %241 = vsyncadd [#allocation6], 0
      %s243 = sshll.u32 [#allocation9], 4
      %s244 = int_to_ptr.vmem [resolvable:$true] %s243
      %s245 = sshll.u32 %s5, 4
      %s246 = int_to_ptr.hbm [resolvable:$true] %s245
      %248 = dma.vmem_to_hbm [thread:$0]  %s244, 128, %s246, [#allocation6]
    $region41: #{tpu_custom_call.1} parent=1 // pred_fallthru
      _
    // Predicated region
    $region42: #{tpu_custom_call.1} parent=1 // pred_check
      _
    $region43: #{tpu_custom_call.1} parent=1 // pred_check_branch
      %250 = sbr.rel (0) target = $region45
    $region44: #{tpu_custom_call.1} parent=1 // pred_region
      %252 = dma.done [#allocation6], 128
    $region45: #{tpu_custom_call.1} parent=1 // pred_fallthru
      _
    %253 = vsyncpa [#allocation5], 1
    %254 = vsyncpa [#allocation8], 1
    %255 = vsyncpa [#allocation6], 1

</llo_original>
